<compile_context>
chip_gen: v7x
topology: tpu7x:2x2x1
jax: 0.10.0
libtpu: 0.0.40
codegen_flags: <defaults>
</compile_context>

<pallas_src>
import functools

import jax
import jax.numpy as jnp
from jax import lax
from jax.experimental import pallas as pl
from jax.experimental.pallas import tpu as pltpu

BLOCK_SIZE = 256
DROPOUT = 0.3  # unused at inference (eval-mode dropout == identity)
EMBEDDING_SIZE = 128


def _head_kernel(x_ref, w_ref, ot_ref, *, head_size):
    # x_ref: (Bblk, T, C)   w_ref: (C, 3H)   ot_ref: (Bblk, H, T)  [lane-dense output]
    x = x_ref[...]
    w = w_ref[...]
    in_dtype = x.dtype

    # Fused K/Q/V projection: (Bblk, T, 3H), accumulated in f32 on the MXU.
    kqv = lax.dot_general(
        x, w,
        dimension_numbers=(((2,), (0,)), ((), ())),
        preferred_element_type=jnp.float32,
    )

    H = head_size
    # NOTE: these minor-dim slices (lane offsets 0/H/2H of a 3H-wide dim) are not
    # 128-lane aligned and lower to XLU lane shifts; the XLU has slack here
    # (DMA/MXU-bound kernel), so they are free filler -- leave as-is.
    k = kqv[..., 0 * H:1 * H].astype(in_dtype)
    q = kqv[..., 1 * H:2 * H].astype(in_dtype)  # 1/sqrt(H) already folded into wq
    v = kqv[..., 2 * H:3 * H].astype(in_dtype)

    # Attention scores (Bblk, Tq, Tk): contract the feature dim directly (no explicit
    # k transpose through the XLU).
    wei = lax.dot_general(
        q, k,
        dimension_numbers=(((2,), (2,)), ((0,), (0,))),
        preferred_element_type=jnp.float32,
    )

    # Causal (tril) mask via thin iotas broadcast at compare time.
    T = wei.shape[1]
    row = lax.broadcasted_iota(jnp.int32, (T, 1), 0)
    col = lax.broadcasted_iota(jnp.int32, (1, T), 1)
    wei = jnp.where((col <= row)[None, :, :], wei, -jnp.inf)

    # Numerically stable softmax statistics in f32; probabilities stay UN-normalized
    # here -- normalization happens after the PV matmul on the much smaller output.
    wei_max = jnp.max(wei, axis=-1, keepdims=True)
    p = jnp.exp(wei - wei_max)                      # (Bblk, T, T) f32, unnormalized
    denom = jnp.sum(p, axis=-1)                     # (Bblk, T) f32

    # Dropout: identity in eval mode.

    # Transposed PV product: out_t[b, h, tq] = sum_tk v[b, tk, h] * p[b, tq, tk]
    # -> (Bblk, H, Tq), so the store's minor dim is T (lane-dense at full block size).
    out_t = lax.dot_general(
        v, p.astype(in_dtype),
        dimension_numbers=(((1,), (2,)), ((0,), (0,))),
        preferred_element_type=jnp.float32,
    )

    # Normalize on (Bblk, H, T): 16x fewer elements than normalizing p; reciprocal on
    # the EUP slot (off the VPU critical path).
    inv = pl.reciprocal(denom, approx=True)         # (Bblk, T)
    out_t = out_t * inv[:, None, :]

    ot_ref[...] = out_t.astype(ot_ref.dtype)


def _batch_blocking(B):
    """Pick (batch_block, padded_B).

    * Cap the batch block at 8: keeps the double-buffered x blocks plus the
      (Bblk,T,T) f32 score/prob temporaries comfortably inside v5e's 16 MiB default
      scoped VMEM (and v7x's 32 MiB), while amortizing the ~0.35 us per-grid-step
      overhead.
    * Once B > 4, split into >= 2 grid steps so both v7x TensorCores get work.
    * Ragged batches are padded up to a multiple of the block instead of degrading
      to tiny single-sequence blocks.
    """
    if B <= 4:
        return B, B
    b_blk = min(8, -(-B // 2))        # >= 2 steps once B > 4
    n_steps = -(-B // b_blk)          # ceil
    return b_blk, n_steps * b_blk


def head_forward(x, wk, wq, wv, *, compute_dtype=jnp.bfloat16):
    """x: (B, T, C); wk/wq/wv: (C, H) (nn.Linear weight transposed). Returns (B, T, H)."""
    B, T, C = x.shape
    H = wk.shape[1]
    assert T <= BLOCK_SIZE
    assert C == EMBEDDING_SIZE
    assert wk.shape == wq.shape == wv.shape == (C, H)

    out_dtype = x.dtype
    scale = H ** -0.5

    # Fuse the three projections into one lane-wider weight; fold the attention scale
    # into the query columns (free: no in-kernel pass over the (Bblk,T,T) scores).
    w_kqv = jnp.concatenate([wk, wq * scale, wv], axis=1).astype(compute_dtype)  # (C, 3H)
    x_in = x.astype(compute_dtype)

    b_blk, b_pad = _batch_blocking(B)
    if b_pad != B:
        x_in = jnp.pad(x_in, ((0, b_pad - B), (0, 0), (0, 0)))
    grid = (b_pad // b_blk,)

    kernel = functools.partial(_head_kernel, head_size=H)
    out_t = pl.pallas_call(
        kernel,
        out_shape=jax.ShapeDtypeStruct((b_pad, H, T), out_dtype),
        grid_spec=pltpu.PrefetchScalarGridSpec(
            num_scalar_prefetch=0,
            grid=grid,
            in_specs=[
                pl.BlockSpec((b_blk, T, C), lambda b: (b, 0, 0)),
                pl.BlockSpec((C, 3 * H), lambda b: (0, 0)),
            ],
            out_specs=pl.BlockSpec((b_blk, H, T), lambda b: (b, 0, 0)),
        ),
        compiler_params=pltpu.CompilerParams(
            dimension_semantics=("parallel",),
        ),
    )(x_in, w_kqv)

    # Layout plumbing back to the module's (B, T, H); drop batch padding.
    out = jnp.transpose(out_t, (0, 2, 1))
    return out[:B]


if __name__ == "__main__":
    # Small, deterministic shapes consistent with the module:
    # C must equal EMBEDDING_SIZE (=128) per nn.Linear(EMBEDDING_SIZE, head_size).
    B, T, C = 2, 8, EMBEDDING_SIZE
    head_size = 16

    key = jax.random.PRNGKey(0)
    kx, kk, kq, kv = jax.random.split(key, 4)

    x = jax.random.normal(kx, (B, T, C), dtype=jnp.float32)
    # nn.Linear weight shape is (head_size, C); store transposed as (C, head_size).
    wk = (jax.random.normal(kk, (head_size, C), dtype=jnp.float32) * (C ** -0.5)).T
    wq = (jax.random.normal(kq, (head_size, C), dtype=jnp.float32) * (C ** -0.5)).T
    wv = (jax.random.normal(kv, (head_size, C), dtype=jnp.float32) * (C ** -0.5)).T

    out = head_forward(x, wk, wq, wv)
    jax.block_until_ready(out)

    # Pure-JAX reference. The kernel rounds inputs to bf16 (f32 accumulation), so the
    # reference uses the same bf16-rounded inputs for a tight, fair comparison.
    def ref(x, wk, wq, wv):
        xq = x.astype(jnp.bfloat16).astype(jnp.float32)
        wkq = wk.astype(jnp.bfloat16).astype(jnp.float32)
        wqq = wq.astype(jnp.bfloat16).astype(jnp.float32)
        wvq = wv.astype(jnp.bfloat16).astype(jnp.float32)
        k = xq @ wkq
        q = xq @ wqq
        v = xq @ wvq
        wei = (q @ jnp.swapaxes(k, -2, -1)) * (k.shape[-1] ** -0.5)
        mask = jnp.tril(jnp.ones((T, T), dtype=bool))
        wei = jnp.where(mask, wei, -jnp.inf)
        wei = jax.nn.softmax(wei, axis=-1)
        return wei @ v

    expected = ref(x, wk, wq, wv)
    assert out.shape == (B, T, head_size)
    assert not bool(jnp.any(jnp.isnan(out)))
    # Tolerance covers bf16 probability rounding + the approx (EUP) reciprocal.
    assert jnp.allclose(out, expected, atol=1e-2, rtol=1e-2)

    print("KERNEL_OK")
</pallas_src>

<mosaic_0001>
module attributes {stable_mosaic.version = 11 : i64} {
  func.func @_head_kernel(%arg0: i32, %arg1: memref<2x8x128xbf16, #tpu.memory_space<vmem>>, %arg2: memref<128x48xbf16, #tpu.memory_space<vmem>>, %arg3: memref<2x16x8xf32, #tpu.memory_space<vmem>>) attributes {dimension_semantics = [#tpu.dimension_semantics<parallel>], iteration_bounds = array<i64: 1>, scalar_prefetch = 0 : i64, scratch_operands = 0 : i64, tpu.core_type = #tpu.core_type<tc>, window_params = [{transform_indices = @transform_0, window_bounds = array<i64: 2, 8, 128>}, {pipeline_mode = #tpu.pipeline_mode<synchronous>, transform_indices = @transform_1, window_bounds = array<i64: 128, 48>}, {transform_indices = @transform_2, window_bounds = array<i64: 2, 16, 8>}]} {
    %c0 = arith.constant 0 : index
    %c0_0 = arith.constant 0 : index
    %c0_1 = arith.constant 0 : index
    %0 = vector.load %arg1[%c0, %c0_0, %c0_1] : memref<2x8x128xbf16, #tpu.memory_space<vmem>>, vector<2x8x128xbf16>
    %c0_2 = arith.constant 0 : index
    %c0_3 = arith.constant 0 : index
    %1 = vector.load %arg2[%c0_2, %c0_3] : memref<128x48xbf16, #tpu.memory_space<vmem>>, vector<128x48xbf16>
    %cst = arith.constant dense<0.000000e+00> : vector<2x8x48xf32>
    %2 = tpu.matmul %0, %1, %cst {dimension_numbers = #tpu.dot_dimension_numbers<[2], [0], [0, 1], [1], [0, 0, 0, 1, 1, 1], [], []>} : vector<2x8x128xbf16>, vector<128x48xbf16>, vector<2x8x48xf32> -> vector<2x8x48xf32>
    %3 = vector.extract_strided_slice %2 {offsets = [0, 0, 0], sizes = [2, 8, 16], strides = [1, 1, 1]} : vector<2x8x48xf32> to vector<2x8x16xf32>
    %4 = arith.truncf %3 : vector<2x8x16xf32> to vector<2x8x16xbf16>
    %5 = vector.extract_strided_slice %2 {offsets = [0, 0, 16], sizes = [2, 8, 16], strides = [1, 1, 1]} : vector<2x8x48xf32> to vector<2x8x16xf32>
    %6 = arith.truncf %5 : vector<2x8x16xf32> to vector<2x8x16xbf16>
    %7 = vector.extract_strided_slice %2 {offsets = [0, 0, 32], sizes = [2, 8, 16], strides = [1, 1, 1]} : vector<2x8x48xf32> to vector<2x8x16xf32>
    %8 = arith.truncf %7 : vector<2x8x16xf32> to vector<2x8x16xbf16>
    %cst_4 = arith.constant dense<0.000000e+00> : vector<2x8x8xf32>
    %9 = tpu.matmul %6, %4, %cst_4 {dimension_numbers = #tpu.dot_dimension_numbers<[2], [2], [1], [1], [0, 0, 0, 1, 1, 1], [0], [0]>} : vector<2x8x16xbf16>, vector<2x8x16xbf16>, vector<2x8x8xf32> -> vector<2x8x8xf32>
    %10 = tpu.iota {dimensions = array<i32: 0>} : vector<8x1xi32>
    %11 = tpu.iota {dimensions = array<i32: 1>} : vector<1x8xi32>
    %12 = vector.broadcast %11 : vector<1x8xi32> to vector<8x8xi32>
    %13 = vector.broadcast %10 : vector<8x1xi32> to vector<8x8xi32>
    %14 = arith.cmpi sle, %12, %13 : vector<8x8xi32>
    %15 = vector.shape_cast %14 : vector<8x8xi1> to vector<1x8x8xi1>
    %cst_5 = arith.constant 0xFF800000 : f32
    %16 = vector.shape_cast %15 : vector<1x8x8xi1> to vector<1x8x8xi1>
    %17 = vector.broadcast %16 : vector<1x8x8xi1> to vector<2x8x8xi1>
    %18 = vector.broadcast %cst_5 : f32 to vector<2x8x8xf32>
    %19 = arith.select %17, %9, %18 : vector<2x8x8xi1>, vector<2x8x8xf32>
    %cst_6 = arith.constant dense<0xFF800000> : vector<2x8xf32>
    %20 = vector.multi_reduction <maximumf>, %19, %cst_6 [2] : vector<2x8x8xf32> to vector<2x8xf32>
    %21 = vector.shape_cast %20 : vector<2x8xf32> to vector<2x8x1xf32>
    %22 = vector.broadcast %21 : vector<2x8x1xf32> to vector<2x8x8xf32>
    %23 = arith.subf %19, %22 : vector<2x8x8xf32>
    %24 = math.exp %23 : vector<2x8x8xf32>
    %cst_7 = arith.constant dense<0.000000e+00> : vector<2x8xf32>
    %25 = vector.multi_reduction <add>, %24, %cst_7 [2] : vector<2x8x8xf32> to vector<2x8xf32>
    %26 = arith.truncf %24 : vector<2x8x8xf32> to vector<2x8x8xbf16>
    %cst_8 = arith.constant dense<0.000000e+00> : vector<2x16x8xf32>
    %27 = tpu.matmul %8, %26, %cst_8 {dimension_numbers = #tpu.dot_dimension_numbers<[1], [2], [2], [1], [0, 0, 0, 2, 1, 1], [0], [0]>} : vector<2x8x16xbf16>, vector<2x8x8xbf16>, vector<2x16x8xf32> -> vector<2x16x8xf32>
    %28 = tpu.reciprocal %25 {approx = true} : vector<2x8xf32> -> vector<2x8xf32>
    %29 = vector.shape_cast %28 : vector<2x8xf32> to vector<2x1x8xf32>
    %30 = vector.broadcast %29 : vector<2x1x8xf32> to vector<2x16x8xf32>
    %31 = arith.mulf %27, %30 : vector<2x16x8xf32>
    %c0_9 = arith.constant 0 : index
    %c0_10 = arith.constant 0 : index
    %c0_11 = arith.constant 0 : index
    %32 = vector.load %arg3[%c0_9, %c0_10, %c0_11] : memref<2x16x8xf32, #tpu.memory_space<vmem>>, vector<2x16x8xf32>
    tpu.vector_store %arg3[%c0_9, %c0_10, %c0_11], %31 {strides = array<i32>} : memref<2x16x8xf32, #tpu.memory_space<vmem>>, vector<2x16x8xf32>,
    return
  }
  func.func @transform_0(%arg0: i32) -> (i32, i32, i32) {
    %c0_i32 = arith.constant 0 : i32
    %c0_i32_0 = arith.constant 0 : i32
    %c0_i32_1 = arith.constant 0 : i32
    return %arg0, %c0_i32, %c0_i32_0 : i32, i32, i32
  }
  func.func @transform_1(%arg0: i32) -> (i32, i32) {
    %c0_i32 = arith.constant 0 : i32
    %c0_i32_0 = arith.constant 0 : i32
    %c0_i32_1 = arith.constant 0 : i32
    return %c0_i32, %c0_i32_0 : i32, i32
  }
  func.func @transform_2(%arg0: i32) -> (i32, i32, i32) {
    %c0_i32 = arith.constant 0 : i32
    %c0_i32_0 = arith.constant 0 : i32
    %c0_i32_1 = arith.constant 0 : i32
    return %arg0, %c0_i32, %c0_i32_0 : i32, i32, i32
  }
}

</mosaic_0001>

<llo_original>
// kernel: tpu_custom_call.1
$region0: #{tpu_custom_call.1}
  #allocation0 [shape = 'u32[]', space=smem, size = 0x4, offset = 0x4, fixed_abs, tag = 'smem constant byte address 0x4 - core index']
  #allocation1 [shape = 'u32[144,128]{1,0:T(1,128)}', space=vmem, size = 0x12000, scoped, tag = 'internal scratch']
  %s0 = inlined_call_operand.vmem [shape: bf16[2,8,128], index: 0, kind: input, shape index: {}]
  %s1 = inlined_call_operand.vmem [shape: bf16[128,48], index: 1, kind: input, shape index: {}]
  %s2 = inlined_call_operand.vmem [shape: f32[2,16,8], index: 2, kind: output, shape index: {}]
  %s3 = sld [smem:[#allocation0]]
  $region18: #{tpu_custom_call.1} parent=0
    _
  %s5 = ssub.s32 1, %s3
  %s6 = scalar_select 0, %s5, %s3
  // Predicated region
  $region2: #{tpu_custom_call.1} parent=0 // pred_check
    _
  $region3: #{tpu_custom_call.1} parent=0 // pred_check_branch
    %8 = sbr.rel (0) target = $region5
  $region4: #{tpu_custom_call.1} parent=0 // pred_region
    _
  $region5: #{tpu_custom_call.1} parent=0 // pred_fallthru
    _
  // Predicated region
  $region6: #{tpu_custom_call.1} parent=0 // pred_check
    _
  $region7: #{tpu_custom_call.1} parent=0 // pred_check_branch
    %10 = sbr.rel (0) target = $region9
  $region8: #{tpu_custom_call.1} parent=0 // pred_region
    _
  $region9: #{tpu_custom_call.1} parent=0 // pred_fallthru
    _
  %v12 = vld [vmem:[%s0] sm:$0xf]
  %v13 = vld [vmem:[%s0 + $0x4] sm:$0xf]
  %v14 = vld [vmem:[%s1] sm:$0xf]
  %v15 = vld [vmem:[%s1 + $0x4] sm:$0xf]
  %v16 = vld [vmem:[%s1 + $0x8] sm:$0xf]
  %v17 = vld [vmem:[%s1 + $0xc] sm:$0xf]
  %v18 = vld [vmem:[%s1 + $0x10] sm:$0xf]
  %v19 = vld [vmem:[%s1 + $0x14] sm:$0xf]
  %v20 = vld [vmem:[%s1 + $0x18] sm:$0xf]
  %v21 = vld [vmem:[%s1 + $0x1c] sm:$0xf]
  %v22 = vld [vmem:[%s1 + $0x20] sm:$0xf]
  %v23 = vld [vmem:[%s1 + $0x24] sm:$0xf]
  %v24 = vld [vmem:[%s1 + $0x28] sm:$0xf]
  %v25 = vld [vmem:[%s1 + $0x2c] sm:$0xf]
  %v26 = vld [vmem:[%s1 + $0x30] sm:$0xf]
  %v27 = vld [vmem:[%s1 + $0x34] sm:$0xf]
  %v28 = vld [vmem:[%s1 + $0x38] sm:$0xf]
  %v29 = vld [vmem:[%s1 + $0x3c] sm:$0xf]
  %v32 = vunpack.c.l.b16 %v12
  %v33 = vunpack.c.l.b16 %v13
  %v34 = vpack.c.b16 %v33, %v32
  %v52 = vunpack.c.l.b16 %v14
  %v53 = vunpack.c.l.b16 %v15
  %v54 = vunpack.c.l.b16 %v16
  %v55 = vunpack.c.l.b16 %v17
  %v56 = vunpack.c.l.b16 %v18
  %v57 = vunpack.c.l.b16 %v19
  %v58 = vunpack.c.l.b16 %v20
  %v59 = vunpack.c.l.b16 %v21
  %v60 = vunpack.c.l.b16 %v22
  %v61 = vunpack.c.l.b16 %v23
  %v62 = vunpack.c.l.b16 %v24
  %v63 = vunpack.c.l.b16 %v25
  %v64 = vunpack.c.l.b16 %v26
  %v65 = vunpack.c.l.b16 %v27
  %v66 = vunpack.c.l.b16 %v28
  %v67 = vunpack.c.l.b16 %v29
  %v68 = vpack.c.b16 %v53, %v52
  %v69 = vpack.c.b16 %v55, %v54
  %v70 = vpack.c.b16 %v57, %v56
  %v71 = vpack.c.b16 %v59, %v58
  %v72 = vpack.c.b16 %v61, %v60
  %v73 = vpack.c.b16 %v63, %v62
  %v74 = vpack.c.b16 %v65, %v64
  %v75 = vpack.c.b16 %v67, %v66
  %84 = vmatprep.subr.bf16.mxu0 0
  %85 = vmatpush1.bf16.msra.mxu0 %v68
  %86 = vmatprep.subr.bf16.mxu0 0
  %87 = vmatpush1.bf16.msra.mxu0 %v69
  %88 = vmatprep.subr.bf16.mxu0 0
  %89 = vmatpush1.bf16.msra.mxu0 %v70
  %90 = vmatprep.subr.bf16.mxu0 0
  %91 = vmatpush1.bf16.msra.mxu0 %v71
  %92 = vmatprep.subr.bf16.mxu0 0
  %93 = vmatpush1.bf16.msra.mxu0 %v72
  %94 = vmatprep.subr.bf16.mxu0 0
  %95 = vmatpush1.bf16.msra.mxu0 %v73
  %96 = vmatprep.subr.bf16.mxu0 0
  %97 = vmatpush1.bf16.msra.mxu0 %v74
  %98 = vmatprep.subr.bf16.mxu0 0
  %99 = vmatpush1.bf16.msra.mxu0 %v75
  %100 = vmatprep.subr.bf16.mxu0 0
  %101 = vmatpush1.bf16.msra.mxu0 0
  %102 = vmatprep.subr.bf16.mxu0 0
  %103 = vmatpush1.bf16.msra.mxu0 0
  %104 = vmatprep.subr.bf16.mxu0 0
  %105 = vmatpush1.bf16.msra.mxu0 0
  %106 = vmatprep.subr.bf16.mxu0 0
  %107 = vmatpush1.bf16.msra.mxu0 0
  %108 = vmatprep.subr.bf16.mxu0 0
  %109 = vmatpush1.bf16.msra.mxu0 0
  %110 = vmatprep.subr.bf16.mxu0 0
  %111 = vmatpush1.bf16.msra.mxu0 0
  %112 = vmatprep.subr.bf16.mxu0 0
  %113 = vmatpush1.bf16.msra.mxu0 0
  %114 = vmatprep.subr.bf16.mxu0 0
  %115 = vmatpush1.bf16.msra.mxu0 0
  %116 = vmatprep.mubr.bf16.mxu0 0
  %117 = vmatmul.mubr.bf16.gmra.mrb[0].mxu0 %v34
  %v118 = vpop.f32.mrb[0].mxu0
  %v119 = vadd.f32 0.0, %v118
  %v120 = vpop.f32.mrb[0].mxu0
  %v121 = vpop.f32.mrb[0].mxu0
  %v122 = vadd.f32 0.0, %v121
  %v123 = vpop.f32.mrb[0].mxu0
  %124 = vdwg.mxu0
  %v125 = vpack.c.bf16 %v119, %v119
  %v126 = vpack.c.bf16 %v122, %v122
  %128 = vrot.lane.b32.xlu0 %v125, 112
  %v129 = vpop.permute.xlu0 %128
  %vm130 = vcmask 130048
  %v132 = vsel %vm130, %v129, 0
  %v135 = vsel %vm130, %v125, 0
  %137 = vmatprep.subr.bf16.mxu0 0
  %138 = vmatpush1.bf16.xpose.msra.mxu0 %v135
  %139 = vmatprep.subr.bf16.mxu0 0
  %140 = vmatpush1.bf16.xpose.msra.mxu0 0
  %141 = vmatprep.subr.bf16.mxu0 0
  %142 = vmatpush1.bf16.xpose.msra.mxu0 0
  %143 = vmatprep.subr.bf16.mxu0 0
  %144 = vmatpush1.bf16.xpose.msra.mxu0 0
  %145 = vmatprep.subr.bf16.mxu0 0
  %146 = vmatpush1.bf16.xpose.msra.mxu0 0
  %147 = vmatprep.subr.bf16.mxu0 0
  %148 = vmatpush1.bf16.xpose.msra.mxu0 0
  %149 = vmatprep.subr.bf16.mxu0 0
  %150 = vmatpush1.bf16.xpose.msra.mxu0 0
  %151 = vmatprep.subr.bf16.mxu0 0
  %152 = vmatpush1.bf16.xpose.msra.mxu0 0
  %153 = vmatprep.subr.bf16.mxu0 0
  %154 = vmatpush1.bf16.xpose.msra.mxu0 0
  %155 = vmatprep.subr.bf16.mxu0 0
  %156 = vmatpush1.bf16.xpose.msra.mxu0 0
  %157 = vmatprep.subr.bf16.mxu0 0
  %158 = vmatpush1.bf16.xpose.msra.mxu0 0
  %159 = vmatprep.subr.bf16.mxu0 0
  %160 = vmatpush1.bf16.xpose.msra.mxu0 0
  %161 = vmatprep.subr.bf16.mxu0 0
  %162 = vmatpush1.bf16.xpose.msra.mxu0 0
  %163 = vmatprep.subr.bf16.mxu0 0
  %164 = vmatpush1.bf16.xpose.msra.mxu0 0
  %165 = vmatprep.subr.bf16.mxu0 0
  %166 = vmatpush1.bf16.xpose.msra.mxu0 0
  %167 = vmatprep.subr.bf16.mxu0 0
  %168 = vmatpush1.bf16.xpose.msra.mxu0 0
  %169 = vmatprep.mubr.bf16.mxu0 0
  %170 = vmatmul.mubr.bf16.gmra.mrb[0].mxu0 %v132
  %v171 = vpop.f32.mrb[0].mxu0
  %v172 = vadd.f32 0.0, %v171
  %v173 = vpop.f32.mrb[0].mxu0
  %v174 = vpop.f32.mrb[0].mxu0
  %v175 = vpop.f32.mrb[0].mxu0
  %176 = vdwg.mxu0
  %178 = vrot.lane.b32.xlu0 %v126, 112
  %v179 = vpop.permute.xlu0 %178
  %v181 = vsel %vm130, %v179, 0
  %v184 = vsel %vm130, %v126, 0
  %186 = vmatprep.subr.bf16.mxu0 0
  %187 = vmatpush1.bf16.xpose.msra.mxu0 %v184
  %188 = vmatprep.subr.bf16.mxu0 0
  %189 = vmatpush1.bf16.xpose.msra.mxu0 0
  %190 = vmatprep.subr.bf16.mxu0 0
  %191 = vmatpush1.bf16.xpose.msra.mxu0 0
  %192 = vmatprep.subr.bf16.mxu0 0
  %193 = vmatpush1.bf16.xpose.msra.mxu0 0
  %194 = vmatprep.subr.bf16.mxu0 0
  %195 = vmatpush1.bf16.xpose.msra.mxu0 0
  %196 = vmatprep.subr.bf16.mxu0 0
  %197 = vmatpush1.bf16.xpose.msra.mxu0 0
  %198 = vmatprep.subr.bf16.mxu0 0
  %199 = vmatpush1.bf16.xpose.msra.mxu0 0
  %200 = vmatprep.subr.bf16.mxu0 0
  %201 = vmatpush1.bf16.xpose.msra.mxu0 0
  %202 = vmatprep.subr.bf16.mxu0 0
  %203 = vmatpush1.bf16.xpose.msra.mxu0 0
  %204 = vmatprep.subr.bf16.mxu0 0
  %205 = vmatpush1.bf16.xpose.msra.mxu0 0
  %206 = vmatprep.subr.bf16.mxu0 0
  %207 = vmatpush1.bf16.xpose.msra.mxu0 0
  %208 = vmatprep.subr.bf16.mxu0 0
  %209 = vmatpush1.bf16.xpose.msra.mxu0 0
  %210 = vmatprep.subr.bf16.mxu0 0
  %211 = vmatpush1.bf16.xpose.msra.mxu0 0
  %212 = vmatprep.subr.bf16.mxu0 0
  %213 = vmatpush1.bf16.xpose.msra.mxu0 0
  %214 = vmatprep.subr.bf16.mxu0 0
  %215 = vmatpush1.bf16.xpose.msra.mxu0 0
  %216 = vmatprep.subr.bf16.mxu0 0
  %217 = vmatpush1.bf16.xpose.msra.mxu0 0
  %218 = vmatprep.mubr.bf16.mxu0 0
  %219 = vmatmul.mubr.bf16.gmra.mrb[0].mxu0 %v181
  %v220 = vpop.f32.mrb[0].mxu0
  %v221 = vadd.f32 0.0, %v220
  %v222 = vpop.f32.mrb[0].mxu0
  %v223 = vpop.f32.mrb[0].mxu0
  %v224 = vpop.f32.mrb[0].mxu0
  %225 = vdwg.mxu0
  %v226 = vlaneseq
  %v227 = vshrl.u32 %v226, 7
  %v228 = vlaneseq
  %v229 = vand.u32 %v228, 127
  %vm230 = vcmp.le.s32.totalorder %v229, %v227
  %v231 = vsel %vm230, 1, 0
  %vm232 = vcmp.eq.s32.totalorder %v231, 1
  %v233 = vsel %vm232, %v172, -inf
  %v234 = vsel %vm232, %v221, -inf
  %vm235 = vcmask 64512
  %v236 = vsel %vm235, %v233, -inf
  %237 = vmax.xlane.f32.xlu0 %v236
  %v238 = vpop.xlane.xlu0 %237
  %v239 = vsel %vm235, %v234, -inf
  %240 = vmax.xlane.f32.xlu0 %v239
  %v241 = vpop.xlane.xlu0 %240
  %v242 = vsub.f32 %v233, %v238
  %v243 = vsub.f32 %v234, %v241
  %v244 = vmul.f32 %v242, 1.442695
  %v245 = vpow.pop %v244
  %v246 = vmul.f32 %v243, 1.442695
  %v247 = vpow.pop %v246
  %v248 = vsel %vm235, %v245, 0.0
  %249 = vadd.xlane.f32.xlu0 %v248
  %v250 = vpop.xlane.xlu0 %249
  %v251 = vsel %vm235, %v247, 0.0
  %252 = vadd.xlane.f32.xlu0 %v251
  %v253 = vpop.xlane.xlu0 %252
  %v254 = vpack.c.bf16 %v245, %v245
  %v255 = vpack.c.bf16 %v247, %v247
  %256 = vrot.lane.b32.xlu0 %v125, 96
  %v257 = vpop.permute.xlu0 %256
  %259 = vxpose.xlu0.c.b16.start [1/8] %v257, 128
  %260 = vxpose.xlu0.c.b16.cont [2/8] 0, 128
  %261 = vxpose.xlu0.c.b16.cont [3/8] 0, 128
  %262 = vxpose.xlu0.c.b16.cont [4/8] 0, 128
  %263 = vxpose.xlu0.c.b16.cont [5/8] 0, 128
  %264 = vxpose.xlu0.c.b16.cont [6/8] 0, 128
  %265 = vxpose.xlu0.c.b16.cont [7/8] 0, 128
  %266 = vxpose.xlu0.c.b16.end [8/8] 0, 128
  %v267 = vpop.trf.xlu0
  %v268 = vpop.trf.xlu0
  %v269 = vpop.trf.xlu0
  %v270 = vpop.trf.xlu0
  %v271 = vpop.trf.xlu0
  %v272 = vpop.trf.xlu0
  %v273 = vpop.trf.xlu0
  %v274 = vpop.trf.xlu0
  %v276 = vsel %vm235, %v267, 0
  %v279 = vsel %vm235, %v254, 0
  %281 = vmatprep.subr.bf16.mxu0 0
  %282 = vmatpush1.bf16.xpose.msra.mxu0 %v279
  %283 = vmatprep.subr.bf16.mxu0 0
  %284 = vmatpush1.bf16.xpose.msra.mxu0 0
  %285 = vmatprep.subr.bf16.mxu0 0
  %286 = vmatpush1.bf16.xpose.msra.mxu0 0
  %287 = vmatprep.subr.bf16.mxu0 0
  %288 = vmatpush1.bf16.xpose.msra.mxu0 0
  %289 = vmatprep.subr.bf16.mxu0 0
  %290 = vmatpush1.bf16.xpose.msra.mxu0 0
  %291 = vmatprep.subr.bf16.mxu0 0
  %292 = vmatpush1.bf16.xpose.msra.mxu0 0
  %293 = vmatprep.subr.bf16.mxu0 0
  %294 = vmatpush1.bf16.xpose.msra.mxu0 0
  %295 = vmatprep.subr.bf16.mxu0 0
  %296 = vmatpush1.bf16.xpose.msra.mxu0 0
  %297 = vmatprep.subr.bf16.mxu0 0
  %298 = vmatpush1.bf16.xpose.msra.mxu0 0
  %299 = vmatprep.subr.bf16.mxu0 0
  %300 = vmatpush1.bf16.xpose.msra.mxu0 0
  %301 = vmatprep.subr.bf16.mxu0 0
  %302 = vmatpush1.bf16.xpose.msra.mxu0 0
  %303 = vmatprep.subr.bf16.mxu0 0
  %304 = vmatpush1.bf16.xpose.msra.mxu0 0
  %305 = vmatprep.subr.bf16.mxu0 0
  %306 = vmatpush1.bf16.xpose.msra.mxu0 0
  %307 = vmatprep.subr.bf16.mxu0 0
  %308 = vmatpush1.bf16.xpose.msra.mxu0 0
  %309 = vmatprep.subr.bf16.mxu0 0
  %310 = vmatpush1.bf16.xpose.msra.mxu0 0
  %311 = vmatprep.subr.bf16.mxu0 0
  %312 = vmatpush1.bf16.xpose.msra.mxu0 0
  %313 = vmatprep.mubr.bf16.mxu0 0
  %314 = vmatmul.mubr.bf16.gmra.mrb[0].mxu0 %v276
  %v315 = vpop.f32.mrb[0].mxu0
  %v316 = vadd.f32 0.0, %v315
  %v317 = vpop.f32.mrb[0].mxu0
  %v318 = vpop.f32.mrb[0].mxu0
  %v319 = vadd.f32 0.0, %v318
  %v320 = vpop.f32.mrb[0].mxu0
  %321 = vdwg.mxu0
  %322 = vrot.lane.b32.xlu0 %v126, 96
  %v323 = vpop.permute.xlu0 %322
  %325 = vxpose.xlu0.c.b16.start [1/8] %v323, 128
  %326 = vxpose.xlu0.c.b16.cont [2/8] 0, 128
  %327 = vxpose.xlu0.c.b16.cont [3/8] 0, 128
  %328 = vxpose.xlu0.c.b16.cont [4/8] 0, 128
  %329 = vxpose.xlu0.c.b16.cont [5/8] 0, 128
  %330 = vxpose.xlu0.c.b16.cont [6/8] 0, 128
  %331 = vxpose.xlu0.c.b16.cont [7/8] 0, 128
  %332 = vxpose.xlu0.c.b16.end [8/8] 0, 128
  %v333 = vpop.trf.xlu0
  %v334 = vpop.trf.xlu0
  %v335 = vpop.trf.xlu0
  %v336 = vpop.trf.xlu0
  %v337 = vpop.trf.xlu0
  %v338 = vpop.trf.xlu0
  %v339 = vpop.trf.xlu0
  %v340 = vpop.trf.xlu0
  %v342 = vsel %vm235, %v333, 0
  %v345 = vsel %vm235, %v255, 0
  %347 = vmatprep.subr.bf16.mxu0 0
  %348 = vmatpush1.bf16.xpose.msra.mxu0 %v345
  %349 = vmatprep.subr.bf16.mxu0 0
  %350 = vmatpush1.bf16.xpose.msra.mxu0 0
  %351 = vmatprep.subr.bf16.mxu0 0
  %352 = vmatpush1.bf16.xpose.msra.mxu0 0
  %353 = vmatprep.subr.bf16.mxu0 0
  %354 = vmatpush1.bf16.xpose.msra.mxu0 0
  %355 = vmatprep.subr.bf16.mxu0 0
  %356 = vmatpush1.bf16.xpose.msra.mxu0 0
  %357 = vmatprep.subr.bf16.mxu0 0
  %358 = vmatpush1.bf16.xpose.msra.mxu0 0
  %359 = vmatprep.subr.bf16.mxu0 0
  %360 = vmatpush1.bf16.xpose.msra.mxu0 0
  %361 = vmatprep.subr.bf16.mxu0 0
  %362 = vmatpush1.bf16.xpose.msra.mxu0 0
  %363 = vmatprep.subr.bf16.mxu0 0
  %364 = vmatpush1.bf16.xpose.msra.mxu0 0
  %365 = vmatprep.subr.bf16.mxu0 0
  %366 = vmatpush1.bf16.xpose.msra.mxu0 0
  %367 = vmatprep.subr.bf16.mxu0 0
  %368 = vmatpush1.bf16.xpose.msra.mxu0 0
  %369 = vmatprep.subr.bf16.mxu0 0
  %370 = vmatpush1.bf16.xpose.msra.mxu0 0
  %371 = vmatprep.subr.bf16.mxu0 0
  %372 = vmatpush1.bf16.xpose.msra.mxu0 0
  %373 = vmatprep.subr.bf16.mxu0 0
  %374 = vmatpush1.bf16.xpose.msra.mxu0 0
  %375 = vmatprep.subr.bf16.mxu0 0
  %376 = vmatpush1.bf16.xpose.msra.mxu0 0
  %377 = vmatprep.subr.bf16.mxu0 0
  %378 = vmatpush1.bf16.xpose.msra.mxu0 0
  %379 = vmatprep.mubr.bf16.mxu0 0
  %380 = vmatmul.mubr.bf16.gmra.mrb[0].mxu0 %v342
  %v381 = vpop.f32.mrb[0].mxu0
  %v382 = vadd.f32 0.0, %v381
  %v383 = vpop.f32.mrb[0].mxu0
  %v384 = vpop.f32.mrb[0].mxu0
  %v385 = vadd.f32 0.0, %v384
  %v386 = vpop.f32.mrb[0].mxu0
  %387 = vdwg.mxu0
  %v388 = vrcp.pop %v250
  %v389 = vrcp.pop %v253
  %v392 = vlaneseq
  %v393 = vshrl.u32 %v392, 7
  %v394 = vsub.s32 %v229, %v393
  %v395 = vrot.slane %v388, %v394
  %v396 = vlaneseq
  %v397 = vshrl.u32 %v396, 7
  %v398 = vsub.s32 %v229, %v397
  %v399 = vrot.slane %v389, %v398
  %vm400 = vcmask 1042434
  %v401 = vsel %vm400, %v395, %v395
  %vm402 = vcmask 1043459
  %v403 = vsel %vm402, %v395, %v401
  %vm404 = vcmask 1044484
  %v405 = vsel %vm404, %v395, %v403
  %vm406 = vcmask 1045509
  %v407 = vsel %vm406, %v395, %v405
  %vm408 = vcmask 1046534
  %v409 = vsel %vm408, %v395, %v407
  %vm410 = vcmask 1047559
  %v411 = vsel %vm410, %v395, %v409
  %v412 = vsel %vm400, %v399, %v399
  %v413 = vsel %vm402, %v399, %v412
  %v414 = vsel %vm404, %v399, %v413
  %v415 = vsel %vm406, %v399, %v414
  %v416 = vsel %vm408, %v399, %v415
  %v417 = vsel %vm410, %v399, %v416
  %v420 = vmul.f32 %v316, %v411
  %v421 = vmul.f32 %v319, %v411
  %v422 = vmul.f32 %v382, %v417
  %v423 = vmul.f32 %v385, %v417
  %424 = vst.msk [vmem:[%s2] sm:$0xff] %vm235, %v420
  %425 = vst.msk [vmem:[%s2 + $0x8] sm:$0xff] %vm235, %v421
  %426 = vst.msk [vmem:[%s2 + $0x10] sm:$0xff] %vm235, %v422
  %427 = vst.msk [vmem:[%s2 + $0x18] sm:$0xff] %vm235, %v423
  // Predicated region
  $region10: #{tpu_custom_call.1} parent=0 // pred_check
    _
  $region11: #{tpu_custom_call.1} parent=0 // pred_check_branch
    %429 = sbr.rel (0) target = $region13
  $region12: #{tpu_custom_call.1} parent=0 // pred_region
    _
  $region13: #{tpu_custom_call.1} parent=0 // pred_fallthru
    _
  // Predicated region
  $region14: #{tpu_custom_call.1} parent=0 // pred_check
    _
  $region15: #{tpu_custom_call.1} parent=0 // pred_check_branch
    %431 = sbr.rel (0) target = $region17
  $region16: #{tpu_custom_call.1} parent=0 // pred_region
    _
  $region17: #{tpu_custom_call.1} parent=0 // pred_fallthru
    _

</llo_original>
